<compile_context>
chip_gen: v6e
topology: v6e:2x2x1
jax: 0.10.0
libtpu: 0.0.40
codegen_flags: <defaults>
</compile_context>

<pallas_src>
import functools

import jax
import jax.numpy as jnp
from jax.experimental import pallas as pl
from jax.experimental.pallas import tpu as pltpu

_SUBLANE = 8  # sublane alignment for f32 second-to-last dims


def _cdiv(a, b):
    return (a + b - 1) // b


def _round_up(n, m):
    return ((n + m - 1) // m) * m


def _mlp_kernel(x_ref, w1_ref, b1_ref, w2_ref, b2_ref, w3_ref, b3_ref, o_ref):
    # fc1 + ReLU
    h1 = jnp.dot(x_ref[...], w1_ref[...], preferred_element_type=jnp.float32)
    h1 = jnp.maximum(h1 + b1_ref[...], 0.0)
    # fc2 + ReLU
    h2 = jnp.dot(h1, w2_ref[...], preferred_element_type=jnp.float32)
    h2 = jnp.maximum(h2 + b2_ref[...], 0.0)
    # fc3 (no activation)
    out = jnp.dot(h2, w3_ref[...], preferred_element_type=jnp.float32)
    o_ref[...] = (out + b3_ref[...]).astype(o_ref.dtype)


def _batch_tiling(batch, block_rows):
    """Pick a batch tile: near-full last tile, even #tiles for v7x megacore."""
    num_tiles = _cdiv(batch, block_rows)
    if num_tiles > 1 and num_tiles % 2 != 0:
        num_tiles += 1  # balance grid steps across 2 TensorCores on v7x
    tm = _round_up(_cdiv(batch, num_tiles), _SUBLANE)
    b_pad = _round_up(batch, tm)
    return tm, b_pad


@functools.partial(jax.jit, static_argnames=("block_rows",))
def value_network_forward(x, params, *, block_rows=1024):
    """Fused forward pass of ValueNetwork.

    x: [B, input_size] float32
    params: dict with w1 [in,h], b1 [1,h], w2 [h,h], b2 [1,h],
            w3 [h,out], b3 [1,out]  (used as-is, no per-call repacking)
    returns: [B, output_size] float32
    """
    w1, b1 = params["w1"], params["b1"]
    w2, b2 = params["w2"], params["b2"]
    w3, b3 = params["w3"], params["b3"]

    in_size, hidden = w1.shape
    out_size = w3.shape[1]
    B = x.shape[0]

    tm, b_pad = _batch_tiling(B, block_rows)
    grid = (b_pad // tm,)

    # Only the batch dim is padded (feature dims stay at their true sizes,
    # which satisfies the "block dim == full array dim" BlockSpec exception).
    if b_pad != B:
        xp = jnp.zeros((b_pad, in_size), x.dtype).at[:B, :].set(x)
    else:
        xp = x

    # Weights/biases: constant block index -> fetched once, resident in VMEM.
    # TODO(synk): if hidden grows to multi-K (hid^2*4B near the 32 MiB v7x
    # scoped-VMEM limit), add a K-tiling grid axis ("arbitrary") with an f32
    # VMEM accumulator instead of keeping full weights resident.
    const = lambda i: (0, 0)

    out_pad = pl.pallas_call(
        _mlp_kernel,
        out_shape=jax.ShapeDtypeStruct((b_pad, out_size), jnp.float32),
        grid=grid,
        in_specs=[
            pl.BlockSpec((tm, in_size), lambda i: (i, 0)),    # x: tiled batch
            pl.BlockSpec((in_size, hidden), const),           # w1 (resident)
            pl.BlockSpec((1, hidden), const),                 # b1
            pl.BlockSpec((hidden, hidden), const),            # w2
            pl.BlockSpec((1, hidden), const),                 # b2
            pl.BlockSpec((hidden, out_size), const),          # w3
            pl.BlockSpec((1, out_size), const),               # b3
        ],
        out_specs=pl.BlockSpec((tm, out_size), lambda i: (i, 0)),
        compiler_params=pltpu.CompilerParams(
            # Batch axis is embarrassingly parallel -> megacore sharding on v7x.
            dimension_semantics=("parallel",),
        ),
    )(xp, w1, b1, w2, b2, w3, b3)

    # Strip batch padding (padded rows hold bias values; they are discarded).
    return out_pad[:B, :]


def init_value_network_params(key, input_size, hidden_size, output_size):
    """Deterministic init mimicking PyTorch nn.Linear default
    (U[-1/sqrt(fan_in), 1/sqrt(fan_in)])."""
    ks = jax.random.split(key, 6)

    def linear(kw, kb, fan_in, fan_out):
        bound = 1.0 / jnp.sqrt(jnp.float32(fan_in))
        w = jax.random.uniform(kw, (fan_in, fan_out), jnp.float32, -bound, bound)
        b = jax.random.uniform(kb, (1, fan_out), jnp.float32, -bound, bound)
        return w, b

    w1, b1 = linear(ks[0], ks[1], input_size, hidden_size)
    w2, b2 = linear(ks[2], ks[3], hidden_size, hidden_size)
    w3, b3 = linear(ks[4], ks[5], hidden_size, output_size)
    return {"w1": w1, "b1": b1, "w2": w2, "b2": b2, "w3": w3, "b3": b3}


def _reference(x, params):
    h1 = jnp.maximum(x @ params["w1"] + params["b1"], 0.0)
    h2 = jnp.maximum(h1 @ params["w2"] + params["b2"], 0.0)
    return h2 @ params["w3"] + params["b3"]


if __name__ == "__main__":
    input_size, hidden_size, output_size = 16, 32, 4
    batch = 8

    key = jax.random.PRNGKey(0)
    k_params, k_x = jax.random.split(key)
    params = init_value_network_params(k_params, input_size, hidden_size, output_size)
    x = jax.random.normal(k_x, (batch, input_size), jnp.float32)

    out = jax.block_until_ready(value_network_forward(x, params))
    ref = _reference(x, params)
    assert out.shape == (batch, output_size)
    assert jnp.allclose(out, ref, atol=1e-5, rtol=1e-5)

    # Also exercise a multi-tile grid (balanced tiles, batch padding path).
    big_b = 1040
    xb = jax.random.normal(jax.random.PRNGKey(1), (big_b, input_size), jnp.float32)
    out_b = jax.block_until_ready(value_network_forward(xb, params, block_rows=512))
    ref_b = _reference(xb, params)
    assert out_b.shape == (big_b, output_size)
    assert jnp.allclose(out_b, ref_b, atol=1e-5, rtol=1e-5)

    print("KERNEL_OK")
</pallas_src>

<mosaic_0001>
module attributes {stable_mosaic.version = 11 : i64} {
  func.func @_mlp_kernel(%arg0: i32, %arg1: memref<8x16xf32, #tpu.memory_space<vmem>>, %arg2: memref<16x32xf32, #tpu.memory_space<vmem>>, %arg3: memref<1x32xf32, #tpu.memory_space<vmem>>, %arg4: memref<32x32xf32, #tpu.memory_space<vmem>>, %arg5: memref<1x32xf32, #tpu.memory_space<vmem>>, %arg6: memref<32x4xf32, #tpu.memory_space<vmem>>, %arg7: memref<1x4xf32, #tpu.memory_space<vmem>>, %arg8: memref<8x4xf32, #tpu.memory_space<vmem>>) attributes {dimension_semantics = [#tpu.dimension_semantics<parallel>], iteration_bounds = array<i64: 1>, scalar_prefetch = 0 : i64, scratch_operands = 0 : i64, tpu.core_type = #tpu.core_type<tc>, window_params = [{transform_indices = @transform_0, window_bounds = array<i64: 8, 16>}, {pipeline_mode = #tpu.pipeline_mode<synchronous>, transform_indices = @transform_1, window_bounds = array<i64: 16, 32>}, {pipeline_mode = #tpu.pipeline_mode<synchronous>, transform_indices = @transform_2, window_bounds = array<i64: 1, 32>}, {pipeline_mode = #tpu.pipeline_mode<synchronous>, transform_indices = @transform_3, window_bounds = array<i64: 32, 32>}, {pipeline_mode = #tpu.pipeline_mode<synchronous>, transform_indices = @transform_4, window_bounds = array<i64: 1, 32>}, {pipeline_mode = #tpu.pipeline_mode<synchronous>, transform_indices = @transform_5, window_bounds = array<i64: 32, 4>}, {pipeline_mode = #tpu.pipeline_mode<synchronous>, transform_indices = @transform_6, window_bounds = array<i64: 1, 4>}, {transform_indices = @transform_7, window_bounds = array<i64: 8, 4>}]} {
    %c0 = arith.constant 0 : index
    %c0_0 = arith.constant 0 : index
    %0 = vector.load %arg1[%c0, %c0_0] : memref<8x16xf32, #tpu.memory_space<vmem>>, vector<8x16xf32>
    %c0_1 = arith.constant 0 : index
    %c0_2 = arith.constant 0 : index
    %1 = vector.load %arg2[%c0_1, %c0_2] : memref<16x32xf32, #tpu.memory_space<vmem>>, vector<16x32xf32>
    %cst = arith.constant dense<0.000000e+00> : vector<8x32xf32>
    %2 = tpu.matmul %0, %1, %cst {dimension_numbers = #tpu.dot_dimension_numbers<[1], [0], [0], [1], [0, 0, 1, 1], [], []>} : vector<8x16xf32>, vector<16x32xf32>, vector<8x32xf32> -> vector<8x32xf32>
    %c0_3 = arith.constant 0 : index
    %c0_4 = arith.constant 0 : index
    %3 = vector.load %arg3[%c0_3, %c0_4] : memref<1x32xf32, #tpu.memory_space<vmem>>, vector<1x32xf32>
    %4 = vector.broadcast %3 : vector<1x32xf32> to vector<8x32xf32>
    %5 = arith.addf %2, %4 : vector<8x32xf32>
    %cst_5 = arith.constant 0.000000e+00 : f32
    %6 = vector.broadcast %cst_5 : f32 to vector<8x32xf32>
    %7 = arith.maximumf %5, %6 : vector<8x32xf32>
    %c0_6 = arith.constant 0 : index
    %c0_7 = arith.constant 0 : index
    %8 = vector.load %arg4[%c0_6, %c0_7] : memref<32x32xf32, #tpu.memory_space<vmem>>, vector<32x32xf32>
    %cst_8 = arith.constant dense<0.000000e+00> : vector<8x32xf32>
    %9 = tpu.matmul %7, %8, %cst_8 {dimension_numbers = #tpu.dot_dimension_numbers<[1], [0], [0], [1], [0, 0, 1, 1], [], []>} : vector<8x32xf32>, vector<32x32xf32>, vector<8x32xf32> -> vector<8x32xf32>
    %c0_9 = arith.constant 0 : index
    %c0_10 = arith.constant 0 : index
    %10 = vector.load %arg5[%c0_9, %c0_10] : memref<1x32xf32, #tpu.memory_space<vmem>>, vector<1x32xf32>
    %11 = vector.broadcast %10 : vector<1x32xf32> to vector<8x32xf32>
    %12 = arith.addf %9, %11 : vector<8x32xf32>
    %cst_11 = arith.constant 0.000000e+00 : f32
    %13 = vector.broadcast %cst_11 : f32 to vector<8x32xf32>
    %14 = arith.maximumf %12, %13 : vector<8x32xf32>
    %c0_12 = arith.constant 0 : index
    %c0_13 = arith.constant 0 : index
    %15 = vector.load %arg6[%c0_12, %c0_13] : memref<32x4xf32, #tpu.memory_space<vmem>>, vector<32x4xf32>
    %cst_14 = arith.constant dense<0.000000e+00> : vector<8x4xf32>
    %16 = tpu.matmul %14, %15, %cst_14 {dimension_numbers = #tpu.dot_dimension_numbers<[1], [0], [0], [1], [0, 0, 1, 1], [], []>} : vector<8x32xf32>, vector<32x4xf32>, vector<8x4xf32> -> vector<8x4xf32>
    %c0_15 = arith.constant 0 : index
    %c0_16 = arith.constant 0 : index
    %17 = vector.load %arg7[%c0_15, %c0_16] : memref<1x4xf32, #tpu.memory_space<vmem>>, vector<1x4xf32>
    %18 = vector.broadcast %17 : vector<1x4xf32> to vector<8x4xf32>
    %19 = arith.addf %16, %18 : vector<8x4xf32>
    %c0_17 = arith.constant 0 : index
    %c0_18 = arith.constant 0 : index
    %20 = vector.load %arg8[%c0_17, %c0_18] : memref<8x4xf32, #tpu.memory_space<vmem>>, vector<8x4xf32>
    tpu.vector_store %arg8[%c0_17, %c0_18], %19 {strides = array<i32>} : memref<8x4xf32, #tpu.memory_space<vmem>>, vector<8x4xf32>,
    return
  }
  func.func @transform_0(%arg0: i32) -> (i32, i32) {
    %c0_i32 = arith.constant 0 : i32
    %c0_i32_0 = arith.constant 0 : i32
    return %arg0, %c0_i32 : i32, i32
  }
  func.func @transform_1(%arg0: i32) -> (i32, i32) {
    %c0_i32 = arith.constant 0 : i32
    %c0_i32_0 = arith.constant 0 : i32
    %c0_i32_1 = arith.constant 0 : i32
    return %c0_i32, %c0_i32_0 : i32, i32
  }
  func.func @transform_2(%arg0: i32) -> (i32, i32) {
    %c0_i32 = arith.constant 0 : i32
    %c0_i32_0 = arith.constant 0 : i32
    %c0_i32_1 = arith.constant 0 : i32
    return %c0_i32, %c0_i32_0 : i32, i32
  }
  func.func @transform_3(%arg0: i32) -> (i32, i32) {
    %c0_i32 = arith.constant 0 : i32
    %c0_i32_0 = arith.constant 0 : i32
    %c0_i32_1 = arith.constant 0 : i32
    return %c0_i32, %c0_i32_0 : i32, i32
  }
  func.func @transform_4(%arg0: i32) -> (i32, i32) {
    %c0_i32 = arith.constant 0 : i32
    %c0_i32_0 = arith.constant 0 : i32
    %c0_i32_1 = arith.constant 0 : i32
    return %c0_i32, %c0_i32_0 : i32, i32
  }
  func.func @transform_5(%arg0: i32) -> (i32, i32) {
    %c0_i32 = arith.constant 0 : i32
    %c0_i32_0 = arith.constant 0 : i32
    %c0_i32_1 = arith.constant 0 : i32
    return %c0_i32, %c0_i32_0 : i32, i32
  }
  func.func @transform_6(%arg0: i32) -> (i32, i32) {
    %c0_i32 = arith.constant 0 : i32
    %c0_i32_0 = arith.constant 0 : i32
    %c0_i32_1 = arith.constant 0 : i32
    return %c0_i32, %c0_i32_0 : i32, i32
  }
  func.func @transform_7(%arg0: i32) -> (i32, i32) {
    %c0_i32 = arith.constant 0 : i32
    %c0_i32_0 = arith.constant 0 : i32
    return %arg0, %c0_i32 : i32, i32
  }
}

</mosaic_0001>

<llo_original>
// kernel: value_network_forward.1
$region0: #{value_network_forward.1}
  #allocation0 [shape = 'u32[]', space=smem, size = 0x4, offset = 0x4, fixed_abs, tag = 'smem constant byte address 0x4 - core index']
  #allocation1 [shape = 'u32[144,128]{1,0:T(1,128)}', space=vmem, size = 0x12000, scoped, tag = 'internal scratch']
  %s0 = inlined_call_operand.vmem [shape: f32[8,16], index: 0, kind: input, shape index: {}]
  %s1 = inlined_call_operand.hbm [shape: f32[16,32], index: 1, kind: input, shape index: {}]
  %s2 = inlined_call_operand.vmem [shape: f32[1,32], index: 2, kind: input, shape index: {}]
  %s3 = inlined_call_operand.vmem [shape: f32[32,32], index: 3, kind: input, shape index: {}]
  %s4 = inlined_call_operand.vmem [shape: f32[1,32], index: 4, kind: input, shape index: {}]
  %s5 = inlined_call_operand.vmem [shape: f32[32,4], index: 5, kind: input, shape index: {}]
  %s6 = inlined_call_operand.hbm [shape: f32[1,4], index: 6, kind: input, shape index: {}]
  %s7 = inlined_call_operand.vmem [shape: f32[8,4], index: 7, kind: output, shape index: {}]
  %s8 = sld [smem:[#allocation0]]
  $region46: #{value_network_forward.1} parent=0
    _
  %s10 = ssub.s32 1, %s8
  %s11 = scalar_select 0, %s10, %s8
  $region1: #{value_network_forward.1} parent=0
    #allocation2 [shape = 'u8[8192]{0}', space=vmem, size = 0x2000, scoped, tag = 'input window, operand 1, single buffered']
    #allocation3 [shape = 's32[1]{0}', space=sflag, size = 0x4, scoped, tag = 'scoped memory for value_network_forward.1']
    #allocation4 [shape = 'u8[512]{0}', space=vmem, size = 0x400, scoped, tag = 'input window, operand 6, single buffered']
    #allocation5 [shape = 's32[1]{0}', space=sflag, size = 0x4, scoped, tag = 'scoped memory for value_network_forward.1']
    %12 = vsyncpa [#allocation3], 0
    %13 = vsyncpa [#allocation5], 0
    // Predicated region
    $region2: #{value_network_forward.1} parent=1 // pred_check
      _
    $region3: #{value_network_forward.1} parent=1 // pred_check_branch
      %15 = sbr.rel (0) target = $region5
    $region4: #{value_network_forward.1} parent=1 // pred_region
      _
    $region5: #{value_network_forward.1} parent=1 // pred_fallthru
      _
    // Predicated region
    $region6: #{value_network_forward.1} parent=1 // pred_check
      _
    $region7: #{value_network_forward.1} parent=1 // pred_check_branch
      %17 = sbr.rel (0) target = $region9
    $region8: #{value_network_forward.1} parent=1 // pred_region
      %s19 = ssub.s32 256, 256
      %20 = vsyncadd [#allocation3], %s19
      %s21 = sshll.u32 [#allocation2], 4
      %s22 = int_to_ptr.vmem [resolvable:$true] %s21
      %27 = dma.hbm_to_vmem [thread:$0]  %s1, 256, %s22, [#allocation3], 128, 128, 8
    $region9: #{value_network_forward.1} parent=1 // pred_fallthru
      _
    // Predicated region
    $region10: #{value_network_forward.1} parent=1 // pred_check
      _
    $region11: #{value_network_forward.1} parent=1 // pred_check_branch
      %29 = sbr.rel (0) target = $region13
    $region12: #{value_network_forward.1} parent=1 // pred_region
      _
    $region13: #{value_network_forward.1} parent=1 // pred_fallthru
      _
    // Predicated region
    $region14: #{value_network_forward.1} parent=1 // pred_check
      _
    $region15: #{value_network_forward.1} parent=1 // pred_check_branch
      %31 = sbr.rel (0) target = $region17
    $region16: #{value_network_forward.1} parent=1 // pred_region
      _
    $region17: #{value_network_forward.1} parent=1 // pred_fallthru
      _
    // Predicated region
    $region18: #{value_network_forward.1} parent=1 // pred_check
      _
    $region19: #{value_network_forward.1} parent=1 // pred_check_branch
      %33 = sbr.rel (0) target = $region21
    $region20: #{value_network_forward.1} parent=1 // pred_region
      _
    $region21: #{value_network_forward.1} parent=1 // pred_fallthru
      _
    // Predicated region
    $region22: #{value_network_forward.1} parent=1 // pred_check
      _
    $region23: #{value_network_forward.1} parent=1 // pred_check_branch
      %35 = sbr.rel (0) target = $region25
    $region24: #{value_network_forward.1} parent=1 // pred_region
      _
    $region25: #{value_network_forward.1} parent=1 // pred_fallthru
      _
    // Predicated region
    $region26: #{value_network_forward.1} parent=1 // pred_check
      _
    $region27: #{value_network_forward.1} parent=1 // pred_check_branch
      %37 = sbr.rel (0) target = $region29
    $region28: #{value_network_forward.1} parent=1 // pred_region
      %s39 = ssub.s32 16, 16
      %40 = vsyncadd [#allocation5], %s39
      %s42 = sshll.u32 [#allocation4], 4
      %s43 = int_to_ptr.vmem [resolvable:$true] %s42
      %45 = dma.hbm_to_vmem [thread:$0]  %s6, 16, %s43, [#allocation5]
    $region29: #{value_network_forward.1} parent=1 // pred_fallthru
      _
    // Predicated region
    $region30: #{value_network_forward.1} parent=1 // pred_check
      _
    $region31: #{value_network_forward.1} parent=1 // pred_check_branch
      %47 = sbr.rel (0) target = $region33
    $region32: #{value_network_forward.1} parent=1 // pred_region
      %48 = dma.done [#allocation3], 256
    $region33: #{value_network_forward.1} parent=1 // pred_fallthru
      _
    // Predicated region
    $region34: #{value_network_forward.1} parent=1 // pred_check
      _
    $region35: #{value_network_forward.1} parent=1 // pred_check_branch
      %50 = sbr.rel (0) target = $region37
    $region36: #{value_network_forward.1} parent=1 // pred_region
      %51 = dma.done [#allocation5], 16
    $region37: #{value_network_forward.1} parent=1 // pred_fallthru
      _
    %v52 = vld [vmem:[%s0] sm:$0xff]
    %v53 = vld [vmem:[#allocation2] sm:$0xff]
    %v54 = vld [vmem:[#allocation2 + $0x8] sm:$0xff]
    %v55 = vld [vmem:[%s2] sm:$0x1]
    %v57 = vlaneseq
    %v58 = vshrl.u32 %v57, 7
    %v59 = vsub.s32 0, %v58
    %v60 = vrot.slane %v55, %v59
    %vm62 = vcmask 130048
    %v64 = vsel %vm62, %v52, 0
    %66 = vmatprep.subr.mxu0 0.0
    %67 = vmatpush1.msra.mxu0 0.0
    %68 = vmatprep.subr.mxu0 0.0
    %69 = vmatpush1.msra.mxu0 0.0
    %70 = vmatprep.subr.mxu0 0.0
    %71 = vmatpush1.msra.mxu0 0.0
    %72 = vmatprep.subr.mxu0 0.0
    %73 = vmatpush1.msra.mxu0 0.0
    %74 = vmatprep.subr.mxu0 0.0
    %75 = vmatpush1.msra.mxu0 0.0
    %76 = vmatprep.subr.mxu0 0.0
    %77 = vmatpush1.msra.mxu0 0.0
    %78 = vmatprep.subr.mxu0 0.0
    %79 = vmatpush1.msra.mxu0 0.0
    %80 = vmatprep.subr.mxu0 0.0
    %81 = vmatpush1.msra.mxu0 0.0
    %82 = vmatprep.subr.mxu0 0.0
    %83 = vmatpush1.msra.mxu0 0.0
    %84 = vmatprep.subr.mxu0 0.0
    %85 = vmatpush1.msra.mxu0 0.0
    %86 = vmatprep.subr.mxu0 0.0
    %87 = vmatpush1.msra.mxu0 0.0
    %88 = vmatprep.subr.mxu0 0.0
    %89 = vmatpush1.msra.mxu0 0.0
    %90 = vmatprep.subr.mxu0 0.0
    %91 = vmatpush1.msra.mxu0 0.0
    %92 = vmatprep.subr.mxu0 0.0
    %93 = vmatpush1.msra.mxu0 0.0
    %94 = vmatprep.subr.mxu0 0.0
    %95 = vmatpush1.msra.mxu0 %v54
    %96 = vmatprep.subr.mxu0 0.0
    %97 = vmatpush1.msra.mxu0 %v53
    %98 = vmatprep.subr.mxu0 0.0
    %99 = vmatpush2.msra.mxu0 0.0
    %100 = vmatprep.subr.mxu0 0.0
    %101 = vmatpush2.msra.mxu0 0.0
    %102 = vmatprep.subr.mxu0 0.0
    %103 = vmatpush2.msra.mxu0 0.0
    %104 = vmatprep.subr.mxu0 0.0
    %105 = vmatpush2.msra.mxu0 0.0
    %106 = vmatprep.subr.mxu0 0.0
    %107 = vmatpush2.msra.mxu0 0.0
    %108 = vmatprep.subr.mxu0 0.0
    %109 = vmatpush2.msra.mxu0 0.0
    %110 = vmatprep.subr.mxu0 0.0
    %111 = vmatpush2.msra.mxu0 0.0
    %112 = vmatprep.subr.mxu0 0.0
    %113 = vmatpush2.msra.mxu0 0.0
    %114 = vmatprep.subr.mxu0 0.0
    %115 = vmatpush2.msra.mxu0 0.0
    %116 = vmatprep.subr.mxu0 0.0
    %117 = vmatpush2.msra.mxu0 0.0
    %118 = vmatprep.subr.mxu0 0.0
    %119 = vmatpush2.msra.mxu0 0.0
    %120 = vmatprep.subr.mxu0 0.0
    %121 = vmatpush2.msra.mxu0 0.0
    %122 = vmatprep.subr.mxu0 0.0
    %123 = vmatpush2.msra.mxu0 0.0
    %124 = vmatprep.subr.mxu0 0.0
    %125 = vmatpush2.msra.mxu0 0.0
    %126 = vmatprep.subr.mxu0 0.0
    %127 = vmatpush2.msra.mxu0 0.0
    %128 = vmatprep.subr.mxu0 0.0
    %129 = vmatpush2.msra.mxu0 0.0
    %130 = vmatprep.mubr.f32.mxu0 0.0
    %131 = vmatmul.mubr.f32.gmra.mxu0 %v64
    %v132 = vpop.f32.mrf.mxu0
    %v133 = vadd.f32 %v60, %v132
    %v134 = vpop.f32.mrf.mxu0
    %135 = vdwg.mxu0
    %v136 = vmax.f32 %v133, 0.0
    %v137 = vld [vmem:[%s3] sm:$0xff]
    %v138 = vld [vmem:[%s3 + $0x8] sm:$0xff]
    %v139 = vld [vmem:[%s3 + $0x10] sm:$0xff]
    %v140 = vld [vmem:[%s3 + $0x18] sm:$0xff]
    %v141 = vld [vmem:[%s4] sm:$0x1]
    %v143 = vlaneseq
    %v144 = vshrl.u32 %v143, 7
    %v145 = vsub.s32 0, %v144
    %v146 = vrot.slane %v141, %v145
    %vm148 = vcmask 261120
    %v150 = vsel %vm148, %v136, 0
    %152 = vmatprep.subr.mxu0 0.0
    %153 = vmatpush1.msra.mxu0 0.0
    %154 = vmatprep.subr.mxu0 0.0
    %155 = vmatpush1.msra.mxu0 0.0
    %156 = vmatprep.subr.mxu0 0.0
    %157 = vmatpush1.msra.mxu0 0.0
    %158 = vmatprep.subr.mxu0 0.0
    %159 = vmatpush1.msra.mxu0 0.0
    %160 = vmatprep.subr.mxu0 0.0
    %161 = vmatpush1.msra.mxu0 0.0
    %162 = vmatprep.subr.mxu0 0.0
    %163 = vmatpush1.msra.mxu0 0.0
    %164 = vmatprep.subr.mxu0 0.0
    %165 = vmatpush1.msra.mxu0 0.0
    %166 = vmatprep.subr.mxu0 0.0
    %167 = vmatpush1.msra.mxu0 0.0
    %168 = vmatprep.subr.mxu0 0.0
    %169 = vmatpush1.msra.mxu0 0.0
    %170 = vmatprep.subr.mxu0 0.0
    %171 = vmatpush1.msra.mxu0 0.0
    %172 = vmatprep.subr.mxu0 0.0
    %173 = vmatpush1.msra.mxu0 0.0
    %174 = vmatprep.subr.mxu0 0.0
    %175 = vmatpush1.msra.mxu0 0.0
    %176 = vmatprep.subr.mxu0 0.0
    %177 = vmatpush1.msra.mxu0 %v140
    %178 = vmatprep.subr.mxu0 0.0
    %179 = vmatpush1.msra.mxu0 %v139
    %180 = vmatprep.subr.mxu0 0.0
    %181 = vmatpush1.msra.mxu0 %v138
    %182 = vmatprep.subr.mxu0 0.0
    %183 = vmatpush1.msra.mxu0 %v137
    %184 = vmatprep.subr.mxu0 0.0
    %185 = vmatpush2.msra.mxu0 0.0
    %186 = vmatprep.subr.mxu0 0.0
    %187 = vmatpush2.msra.mxu0 0.0
    %188 = vmatprep.subr.mxu0 0.0
    %189 = vmatpush2.msra.mxu0 0.0
    %190 = vmatprep.subr.mxu0 0.0
    %191 = vmatpush2.msra.mxu0 0.0
    %192 = vmatprep.subr.mxu0 0.0
    %193 = vmatpush2.msra.mxu0 0.0
    %194 = vmatprep.subr.mxu0 0.0
    %195 = vmatpush2.msra.mxu0 0.0
    %196 = vmatprep.subr.mxu0 0.0
    %197 = vmatpush2.msra.mxu0 0.0
    %198 = vmatprep.subr.mxu0 0.0
    %199 = vmatpush2.msra.mxu0 0.0
    %200 = vmatprep.subr.mxu0 0.0
    %201 = vmatpush2.msra.mxu0 0.0
    %202 = vmatprep.subr.mxu0 0.0
    %203 = vmatpush2.msra.mxu0 0.0
    %204 = vmatprep.subr.mxu0 0.0
    %205 = vmatpush2.msra.mxu0 0.0
    %206 = vmatprep.subr.mxu0 0.0
    %207 = vmatpush2.msra.mxu0 0.0
    %208 = vmatprep.subr.mxu0 0.0
    %209 = vmatpush2.msra.mxu0 0.0
    %210 = vmatprep.subr.mxu0 0.0
    %211 = vmatpush2.msra.mxu0 0.0
    %212 = vmatprep.subr.mxu0 0.0
    %213 = vmatpush2.msra.mxu0 0.0
    %214 = vmatprep.subr.mxu0 0.0
    %215 = vmatpush2.msra.mxu0 0.0
    %216 = vmatprep.mubr.f32.mxu0 0.0
    %217 = vmatmul.mubr.f32.gmra.mxu0 %v150
    %v218 = vpop.f32.mrf.mxu0
    %v219 = vadd.f32 %v146, %v218
    %v220 = vpop.f32.mrf.mxu0
    %221 = vdwg.mxu0
    %v222 = vmax.f32 %v219, 0.0
    %v223 = vld [vmem:[%s5] sm:$0xff]
    %v224 = vld [vmem:[%s5 + $0x8] sm:$0xff]
    %v225 = vld [vmem:[%s5 + $0x10] sm:$0xff]
    %v226 = vld [vmem:[%s5 + $0x18] sm:$0xff]
    %v227 = vld [vmem:[#allocation4] sm:$0x1]
    %v229 = vlaneseq
    %v230 = vshrl.u32 %v229, 7
    %v231 = vsub.s32 0, %v230
    %v232 = vrot.slane %v227, %v231
    %v235 = vsel %vm148, %v222, 0
    %237 = vmatprep.subr.mxu0 0.0
    %238 = vmatpush1.msra.mxu0 0.0
    %239 = vmatprep.subr.mxu0 0.0
    %240 = vmatpush1.msra.mxu0 0.0
    %241 = vmatprep.subr.mxu0 0.0
    %242 = vmatpush1.msra.mxu0 0.0
    %243 = vmatprep.subr.mxu0 0.0
    %244 = vmatpush1.msra.mxu0 0.0
    %245 = vmatprep.subr.mxu0 0.0
    %246 = vmatpush1.msra.mxu0 0.0
    %247 = vmatprep.subr.mxu0 0.0
    %248 = vmatpush1.msra.mxu0 0.0
    %249 = vmatprep.subr.mxu0 0.0
    %250 = vmatpush1.msra.mxu0 0.0
    %251 = vmatprep.subr.mxu0 0.0
    %252 = vmatpush1.msra.mxu0 0.0
    %253 = vmatprep.subr.mxu0 0.0
    %254 = vmatpush1.msra.mxu0 0.0
    %255 = vmatprep.subr.mxu0 0.0
    %256 = vmatpush1.msra.mxu0 0.0
    %257 = vmatprep.subr.mxu0 0.0
    %258 = vmatpush1.msra.mxu0 0.0
    %259 = vmatprep.subr.mxu0 0.0
    %260 = vmatpush1.msra.mxu0 0.0
    %261 = vmatprep.subr.mxu0 0.0
    %262 = vmatpush1.msra.mxu0 %v226
    %263 = vmatprep.subr.mxu0 0.0
    %264 = vmatpush1.msra.mxu0 %v225
    %265 = vmatprep.subr.mxu0 0.0
    %266 = vmatpush1.msra.mxu0 %v224
    %267 = vmatprep.subr.mxu0 0.0
    %268 = vmatpush1.msra.mxu0 %v223
    %269 = vmatprep.subr.mxu0 0.0
    %270 = vmatpush2.msra.mxu0 0.0
    %271 = vmatprep.subr.mxu0 0.0
    %272 = vmatpush2.msra.mxu0 0.0
    %273 = vmatprep.subr.mxu0 0.0
    %274 = vmatpush2.msra.mxu0 0.0
    %275 = vmatprep.subr.mxu0 0.0
    %276 = vmatpush2.msra.mxu0 0.0
    %277 = vmatprep.subr.mxu0 0.0
    %278 = vmatpush2.msra.mxu0 0.0
    %279 = vmatprep.subr.mxu0 0.0
    %280 = vmatpush2.msra.mxu0 0.0
    %281 = vmatprep.subr.mxu0 0.0
    %282 = vmatpush2.msra.mxu0 0.0
    %283 = vmatprep.subr.mxu0 0.0
    %284 = vmatpush2.msra.mxu0 0.0
    %285 = vmatprep.subr.mxu0 0.0
    %286 = vmatpush2.msra.mxu0 0.0
    %287 = vmatprep.subr.mxu0 0.0
    %288 = vmatpush2.msra.mxu0 0.0
    %289 = vmatprep.subr.mxu0 0.0
    %290 = vmatpush2.msra.mxu0 0.0
    %291 = vmatprep.subr.mxu0 0.0
    %292 = vmatpush2.msra.mxu0 0.0
    %293 = vmatprep.subr.mxu0 0.0
    %294 = vmatpush2.msra.mxu0 0.0
    %295 = vmatprep.subr.mxu0 0.0
    %296 = vmatpush2.msra.mxu0 0.0
    %297 = vmatprep.subr.mxu0 0.0
    %298 = vmatpush2.msra.mxu0 0.0
    %299 = vmatprep.subr.mxu0 0.0
    %300 = vmatpush2.msra.mxu0 0.0
    %301 = vmatprep.mubr.f32.mxu0 0.0
    %302 = vmatmul.mubr.f32.gmra.mxu0 %v235
    %v303 = vpop.f32.mrf.mxu0
    %v304 = vadd.f32 %v232, %v303
    %v305 = vpop.f32.mrf.mxu0
    %306 = vdwg.mxu0
    %vm307 = vcmask 31744
    %308 = vst.msk [vmem:[%s7] sm:$0xff] %vm307, %v304
    // Predicated region
    $region38: #{value_network_forward.1} parent=1 // pred_check
      _
    $region39: #{value_network_forward.1} parent=1 // pred_check_branch
      %310 = sbr.rel (0) target = $region41
    $region40: #{value_network_forward.1} parent=1 // pred_region
      _
    $region41: #{value_network_forward.1} parent=1 // pred_fallthru
      _
    // Predicated region
    $region42: #{value_network_forward.1} parent=1 // pred_check
      _
    $region43: #{value_network_forward.1} parent=1 // pred_check_branch
      %312 = sbr.rel (0) target = $region45
    $region44: #{value_network_forward.1} parent=1 // pred_region
      _
    $region45: #{value_network_forward.1} parent=1 // pred_fallthru
      _
    %313 = vsyncpa [#allocation3], 1
    %314 = vsyncpa [#allocation5], 1

</llo_original>
